<compile_context>
chip_gen: v7x
topology: tpu7x:2x2x1
jax: 0.10.0
libtpu: 0.0.40
codegen_flags: <defaults>
</compile_context>

<pallas_src>
import functools

import jax
import jax.numpy as jnp
from jax.experimental import pallas as pl
from jax.experimental.pallas import tpu as pltpu


# ----------------------------------------------------------------------------
# Single fused kernel: conv -> relu -> maxpool -> fc -> cosine-margin head
# ----------------------------------------------------------------------------
def _fused_forward_kernel(
    label_ref,          # SMEM  [B] int32              (scalar prefetch)
    pat_ref,            # VMEM  [KP, 4*B*P] f32        phase-ordered im2col (+ bias row)
    wk_ref,             # VMEM  [Cout, KP] f32         conv weight (+ bias col), K padded
    fcw_ref,            # VMEM  [Cout*P, D] f32        fc weight (PyTorch flatten order)
    fcb_ref,            # VMEM  [1, D] f32             fc bias
    cw_ref,             # VMEM  [C, D] f32             class weights
    feat_ref,           # out   [B, D] f32
    eval_ref,           # out   [B, C] f32
    train_ref,          # out   [B, C] f32
    wn_ref,             # out   [C, D] f32
    *, scale, margin, num_batch, num_classes, cout, pooled_hw,
):
    f32 = jnp.float32
    B, C = num_batch, num_classes
    P = pooled_hw                       # pooled positions per image (Hp*Wp)
    BP = B * P                          # lanes per pooling phase (128 here)

    # --- conv3x3 (+ bias via the constant-1 patch row) as ONE lane-dense MXU
    #     matmul: [Cout, KP] @ [KP, 4*B*P] -------------------------------------
    y = jax.lax.dot_general(wk_ref[...], pat_ref[...],
                            (((1,), (0,)), ((), ())),
                            preferred_element_type=f32)
    y = jnp.maximum(y, 0.0)                             # ReLU (VPU)

    # --- 2x2 / stride-2 maxpool: lanes are ordered (di, dj, b, pi, pj), so the
    #     four pooling phases are contiguous 128-lane-aligned chunks.
    pooled = jnp.maximum(
        jnp.maximum(y[:, 0 * BP:1 * BP], y[:, 1 * BP:2 * BP]),
        jnp.maximum(y[:, 2 * BP:3 * BP], y[:, 3 * BP:4 * BP]),
    )                                                   # [Cout, B*P]

    # --- flatten + FC as ONE matmul ------------------------------------------
    # Re-pack pooled [Cout, (b, p)] -> [B, (c, p)] (PyTorch flatten order c*P+p)
    # with static slices + concatenates (4 KB shuffle), then a single
    # [B, Cout*P] @ [Cout*P, D] MXU matmul — no per-row matmuls, no add chain.
    rows = []
    for b in range(B):
        rows.append(jnp.concatenate(
            [pooled[c:c + 1, b * P:(b + 1) * P] for c in range(cout)], axis=1))
    lhs_fc = jnp.concatenate(rows, axis=0)              # [B, Cout*P]
    f = jnp.dot(lhs_fc, fcw_ref[...],
                preferred_element_type=f32) + fcb_ref[...]          # [B, D]
    feat_ref[...] = f

    # --- inner-product head (CosFace-style margin) ----------------------------
    # F.normalize-compatible: x / max(||x||, eps) == x * rsqrt(max(||x||^2, eps^2))
    # (differs from the PyTorch divide by a few ULPs only).
    eps2 = 1e-24
    f_n = f * jax.lax.rsqrt(
        jnp.maximum(jnp.sum(f * f, axis=1, keepdims=True), eps2))
    w = cw_ref[...]
    w_n = w * jax.lax.rsqrt(
        jnp.maximum(jnp.sum(w * w, axis=1, keepdims=True), eps2))
    wn_ref[...] = w_n                                   # normalized weights [C, D]

    # cosine logits: f_n @ w_n^T via a (1,1)-contracting dot_general — no
    # duplicated/pre-transposed weight input needed.
    cos = jax.lax.dot_general(f_n, w_n, (((1,), (1,)), ((), ())),
                              preferred_element_type=f32)            # [B, C]

    # one-hot margin mask from SMEM labels: two iotas + where, no concatenates.
    cls_iota = jax.lax.broadcasted_iota(jnp.int32, (B, C), 1)
    row_iota = jax.lax.broadcasted_iota(jnp.int32, (B, C), 0)
    lab = jnp.full((B, C), label_ref[0], dtype=jnp.int32)
    for b in range(1, B):
        lab = jnp.where(row_iota == b, label_ref[b], lab)

    scaled = scale * cos
    eval_ref[...] = scaled
    train_ref[...] = jnp.where(cls_iota == lab, scaled - scale * margin, scaled)


# ----------------------------------------------------------------------------
# Wrapper-side repacks (tiny XLA glue) + the single pallas_call
# ----------------------------------------------------------------------------
def _phase_ordered_patches(x, kp):
    """im2col in the kernel's final layout: [KP, (di,dj,b,pi,pj)], K zero-padded.

    Row r = cin*9 + ki*3 + kj matches conv_w.reshape(Cout, Cin*9); row Cin*9 is
    the constant-1 bias tap.  Column m = ((di*2+dj)*B + b)*Hp*Wp + pi*Wp + pj,
    so the four 2x2-pooling phases are contiguous (B*Hp*Wp)-lane chunks.
    """
    B, Cin, H, W = x.shape
    Hp, Wp = H // 2, W // 2
    xpad = jnp.pad(x, ((0, 0), (0, 0), (1, 1), (1, 1)))
    taps = []
    for ci in range(Cin):
        for ki in range(3):
            for kj in range(3):
                phases = []
                for di in range(2):
                    for dj in range(2):
                        s = xpad[:, ci,
                                 di + ki:di + ki + H:2,
                                 dj + kj:dj + kj + W:2]     # [B, Hp, Wp]
                        phases.append(s)
                taps.append(jnp.stack(phases, axis=0))       # [4, B, Hp, Wp]
    pat = jnp.stack(taps, axis=0).reshape(Cin * 9, 4 * B * Hp * Wp)
    pat = pat.astype(jnp.float32)
    ones_row = jnp.ones((1, pat.shape[1]), jnp.float32)      # conv-bias tap
    pat = jnp.concatenate([pat, ones_row], axis=0)           # [Cin*9 + 1, M]
    return jnp.pad(pat, ((0, kp - (Cin * 9 + 1)), (0, 0)))   # [KP, M]


def training_model_forward(x, label, params, class_w, *, scale=16.0, margin=0.35):
    conv_w, conv_b, fc_w, fc_b = params
    B, Cin, H, W = x.shape
    assert H % 2 == 0 and W % 2 == 0, "maxpool 2x2/stride-2 needs even H, W"
    Cout = conv_w.shape[0]
    Hp, Wp = H // 2, W // 2
    P = Hp * Wp
    D = fc_w.shape[1]
    C = class_w.shape[0]
    assert fc_w.shape[0] == Cout * P, "fc weight must match flatten order (c, pi, pj)"
    # Kernel lane slicing is aligned (and fastest) when B*Hp*Wp is a multiple
    # of 128; true for B=2, 16x16 input.  Other sizes still work but relayout.
    KP = -(-(Cin * 9 + 1) // 8) * 8       # taps (+bias row) padded to sublane mult.
    M = 4 * B * P

    pat = _phase_ordered_patches(x, KP)                               # [KP, M]
    wk = jnp.concatenate(
        [conv_w.reshape(Cout, Cin * 9).astype(jnp.float32),
         conv_b.reshape(Cout, 1).astype(jnp.float32)], axis=1)        # bias folded
    wk = jnp.pad(wk, ((0, 0), (0, KP - (Cin * 9 + 1))))               # [Cout, KP]
    fcw = fc_w.astype(jnp.float32)                                    # [Cout*P, D]
    fcb = fc_b.reshape(1, D).astype(jnp.float32)
    cw = class_w.astype(jnp.float32)                                  # [C, D]
    label_i = label.astype(jnp.int32)

    kernel = functools.partial(
        _fused_forward_kernel, scale=scale, margin=margin,
        num_batch=B, num_classes=C, cout=Cout, pooled_hw=P)

    grid_spec = pltpu.PrefetchScalarGridSpec(
        num_scalar_prefetch=1,               # labels live in SMEM
        grid=(1,),
        in_specs=[
            pl.BlockSpec((KP, M), lambda i, lab: (0, 0)),
            pl.BlockSpec((Cout, KP), lambda i, lab: (0, 0)),
            pl.BlockSpec((Cout * P, D), lambda i, lab: (0, 0)),
            pl.BlockSpec((1, D), lambda i, lab: (0, 0)),
            pl.BlockSpec((C, D), lambda i, lab: (0, 0)),
        ],
        out_specs=(
            pl.BlockSpec((B, D), lambda i, lab: (0, 0)),
            pl.BlockSpec((B, C), lambda i, lab: (0, 0)),
            pl.BlockSpec((B, C), lambda i, lab: (0, 0)),
            pl.BlockSpec((C, D), lambda i, lab: (0, 0)),
        ),
    )

    # Advisory cost so XLA overlaps the tiny im2col producer with the kernel.
    cost = pl.CostEstimate(
        flops=2 * (Cout * KP * M + B * (Cout * P) * D + B * D * C),
        transcendentals=B + C,                             # rsqrt per row
        bytes_accessed=4 * (KP * M + Cout * KP + Cout * P * D + D + C * D
                            + B * D + 2 * B * C + C * D) + 4 * B,
    )

    features, eval_logits, train_logits, weights = pl.pallas_call(
        kernel,
        out_shape=(
            jax.ShapeDtypeStruct((B, D), jnp.float32),
            jax.ShapeDtypeStruct((B, C), jnp.float32),
            jax.ShapeDtypeStruct((B, C), jnp.float32),
            jax.ShapeDtypeStruct((C, D), jnp.float32),
        ),
        grid_spec=grid_spec,
        cost_estimate=cost,
        # Single grid point: the whole fused forward fits in a few KB of VMEM.
        compiler_params=pltpu.CompilerParams(dimension_semantics=("arbitrary",)),
    )(label_i, pat, wk, fcw, fcb, cw)
    return features, eval_logits, train_logits, weights


def init_params(key, cin=1, cout=8, h=16, w=16, feat_dim=32, num_classes=10):
    k1, k2, k3 = jax.random.split(key, 3)
    conv_w = 0.1 * jax.random.normal(k1, (cout, cin, 3, 3), jnp.float32)
    conv_b = jnp.zeros((cout,), jnp.float32)
    flat_dim = cout * (h // 2) * (w // 2)
    fc_w = 0.05 * jax.random.normal(k2, (flat_dim, feat_dim), jnp.float32)
    fc_b = jnp.zeros((feat_dim,), jnp.float32)
    class_w = 0.1 * jax.random.normal(k3, (num_classes, feat_dim), jnp.float32)
    return (conv_w, conv_b, fc_w, fc_b), class_w


if __name__ == "__main__":
    B, Cin, H, W = 2, 1, 16, 16
    num_classes, feat_dim = 10, 32

    root = jax.random.PRNGKey(0)
    kx, kp = jax.random.split(root)
    x = jax.random.normal(kx, (B, Cin, H, W), jnp.float32)
    label = jnp.array([3, 7], dtype=jnp.int32)
    params, class_w = init_params(kp, cin=Cin, h=H, w=W,
                                  feat_dim=feat_dim, num_classes=num_classes)

    fwd = jax.jit(training_model_forward)
    features, eval_logits, train_logits, weights = fwd(x, label, params, class_w)
    jax.block_until_ready((features, eval_logits, train_logits, weights))

    assert features.shape == (B, feat_dim)
    assert eval_logits.shape == (B, num_classes)
    assert train_logits.shape == (B, num_classes)
    assert weights.shape == (num_classes, feat_dim)
    assert bool(jnp.all(jnp.isfinite(features)))
    assert bool(jnp.all(jnp.isfinite(eval_logits)))
    assert bool(jnp.all(jnp.isfinite(train_logits)))
    assert bool(jnp.all(jnp.isfinite(weights)))
    # TODO(synk): TrainingModel.SaveInferenceModel is a checkpoint stub; no kernel equivalent.
    print("KERNEL_OK")
</pallas_src>

<mosaic_0001>
module attributes {stable_mosaic.version = 11 : i64} {
  func.func @_fused_forward_kernel(%arg0: i32, %arg1: memref<2xi32, #tpu.memory_space<smem>>, %arg2: memref<16x512xf32, #tpu.memory_space<vmem>>, %arg3: memref<8x16xf32, #tpu.memory_space<vmem>>, %arg4: memref<512x32xf32, #tpu.memory_space<vmem>>, %arg5: memref<1x32xf32, #tpu.memory_space<vmem>>, %arg6: memref<10x32xf32, #tpu.memory_space<vmem>>, %arg7: memref<2x32xf32, #tpu.memory_space<vmem>>, %arg8: memref<2x10xf32, #tpu.memory_space<vmem>>, %arg9: memref<2x10xf32, #tpu.memory_space<vmem>>, %arg10: memref<10x32xf32, #tpu.memory_space<vmem>>) attributes {dimension_semantics = [#tpu.dimension_semantics<arbitrary>], iteration_bounds = array<i64: 1>, scalar_prefetch = 1 : i64, scratch_operands = 0 : i64, tpu.core_type = #tpu.core_type<tc>, window_params = [{pipeline_mode = #tpu.pipeline_mode<synchronous>, transform_indices = @transform_0, window_bounds = array<i64: 16, 512>}, {pipeline_mode = #tpu.pipeline_mode<synchronous>, transform_indices = @transform_1, window_bounds = array<i64: 8, 16>}, {pipeline_mode = #tpu.pipeline_mode<synchronous>, transform_indices = @transform_2, window_bounds = array<i64: 512, 32>}, {pipeline_mode = #tpu.pipeline_mode<synchronous>, transform_indices = @transform_3, window_bounds = array<i64: 1, 32>}, {pipeline_mode = #tpu.pipeline_mode<synchronous>, transform_indices = @transform_4, window_bounds = array<i64: 10, 32>}, {pipeline_mode = #tpu.pipeline_mode<synchronous>, transform_indices = @transform_5, window_bounds = array<i64: 2, 32>}, {pipeline_mode = #tpu.pipeline_mode<synchronous>, transform_indices = @transform_6, window_bounds = array<i64: 2, 10>}, {pipeline_mode = #tpu.pipeline_mode<synchronous>, transform_indices = @transform_7, window_bounds = array<i64: 2, 10>}, {pipeline_mode = #tpu.pipeline_mode<synchronous>, transform_indices = @transform_8, window_bounds = array<i64: 10, 32>}]} {
    %c0 = arith.constant 0 : index
    %c0_0 = arith.constant 0 : index
    %0 = vector.load %arg3[%c0, %c0_0] : memref<8x16xf32, #tpu.memory_space<vmem>>, vector<8x16xf32>
    %c0_1 = arith.constant 0 : index
    %c0_2 = arith.constant 0 : index
    %1 = vector.load %arg2[%c0_1, %c0_2] : memref<16x512xf32, #tpu.memory_space<vmem>>, vector<16x512xf32>
    %cst = arith.constant dense<0.000000e+00> : vector<8x512xf32>
    %2 = tpu.matmul %0, %1, %cst {dimension_numbers = #tpu.dot_dimension_numbers<[1], [0], [0], [1], [0, 0, 1, 1], [], []>} : vector<8x16xf32>, vector<16x512xf32>, vector<8x512xf32> -> vector<8x512xf32>
    %cst_3 = arith.constant 0.000000e+00 : f32
    %3 = vector.broadcast %cst_3 : f32 to vector<8x512xf32>
    %4 = arith.maximumf %2, %3 : vector<8x512xf32>
    %5 = vector.extract_strided_slice %4 {offsets = [0, 0], sizes = [8, 128], strides = [1, 1]} : vector<8x512xf32> to vector<8x128xf32>
    %6 = vector.extract_strided_slice %4 {offsets = [0, 128], sizes = [8, 128], strides = [1, 1]} : vector<8x512xf32> to vector<8x128xf32>
    %7 = arith.maximumf %5, %6 : vector<8x128xf32>
    %8 = vector.extract_strided_slice %4 {offsets = [0, 256], sizes = [8, 128], strides = [1, 1]} : vector<8x512xf32> to vector<8x128xf32>
    %9 = vector.extract_strided_slice %4 {offsets = [0, 384], sizes = [8, 128], strides = [1, 1]} : vector<8x512xf32> to vector<8x128xf32>
    %10 = arith.maximumf %8, %9 : vector<8x128xf32>
    %11 = arith.maximumf %7, %10 : vector<8x128xf32>
    %12 = vector.extract_strided_slice %11 {offsets = [0, 0], sizes = [1, 64], strides = [1, 1]} : vector<8x128xf32> to vector<1x64xf32>
    %13 = vector.extract_strided_slice %11 {offsets = [1, 0], sizes = [1, 64], strides = [1, 1]} : vector<8x128xf32> to vector<1x64xf32>
    %14 = vector.extract_strided_slice %11 {offsets = [2, 0], sizes = [1, 64], strides = [1, 1]} : vector<8x128xf32> to vector<1x64xf32>
    %15 = vector.extract_strided_slice %11 {offsets = [3, 0], sizes = [1, 64], strides = [1, 1]} : vector<8x128xf32> to vector<1x64xf32>
    %16 = vector.extract_strided_slice %11 {offsets = [4, 0], sizes = [1, 64], strides = [1, 1]} : vector<8x128xf32> to vector<1x64xf32>
    %17 = vector.extract_strided_slice %11 {offsets = [5, 0], sizes = [1, 64], strides = [1, 1]} : vector<8x128xf32> to vector<1x64xf32>
    %18 = vector.extract_strided_slice %11 {offsets = [6, 0], sizes = [1, 64], strides = [1, 1]} : vector<8x128xf32> to vector<1x64xf32>
    %19 = vector.extract_strided_slice %11 {offsets = [7, 0], sizes = [1, 64], strides = [1, 1]} : vector<8x128xf32> to vector<1x64xf32>
    %20 = tpu.concatenate %12, %13, %14, %15, %16, %17, %18, %19 in 1 : vector<1x64xf32>, vector<1x64xf32>, vector<1x64xf32>, vector<1x64xf32>, vector<1x64xf32>, vector<1x64xf32>, vector<1x64xf32>, vector<1x64xf32> -> vector<1x512xf32>
    %21 = vector.extract_strided_slice %11 {offsets = [0, 64], sizes = [1, 64], strides = [1, 1]} : vector<8x128xf32> to vector<1x64xf32>
    %22 = vector.extract_strided_slice %11 {offsets = [1, 64], sizes = [1, 64], strides = [1, 1]} : vector<8x128xf32> to vector<1x64xf32>
    %23 = vector.extract_strided_slice %11 {offsets = [2, 64], sizes = [1, 64], strides = [1, 1]} : vector<8x128xf32> to vector<1x64xf32>
    %24 = vector.extract_strided_slice %11 {offsets = [3, 64], sizes = [1, 64], strides = [1, 1]} : vector<8x128xf32> to vector<1x64xf32>
    %25 = vector.extract_strided_slice %11 {offsets = [4, 64], sizes = [1, 64], strides = [1, 1]} : vector<8x128xf32> to vector<1x64xf32>
    %26 = vector.extract_strided_slice %11 {offsets = [5, 64], sizes = [1, 64], strides = [1, 1]} : vector<8x128xf32> to vector<1x64xf32>
    %27 = vector.extract_strided_slice %11 {offsets = [6, 64], sizes = [1, 64], strides = [1, 1]} : vector<8x128xf32> to vector<1x64xf32>
    %28 = vector.extract_strided_slice %11 {offsets = [7, 64], sizes = [1, 64], strides = [1, 1]} : vector<8x128xf32> to vector<1x64xf32>
    %29 = tpu.concatenate %21, %22, %23, %24, %25, %26, %27, %28 in 1 : vector<1x64xf32>, vector<1x64xf32>, vector<1x64xf32>, vector<1x64xf32>, vector<1x64xf32>, vector<1x64xf32>, vector<1x64xf32>, vector<1x64xf32> -> vector<1x512xf32>
    %30 = tpu.concatenate %20, %29 in 0 : vector<1x512xf32>, vector<1x512xf32> -> vector<2x512xf32>
    %c0_4 = arith.constant 0 : index
    %c0_5 = arith.constant 0 : index
    %31 = vector.load %arg4[%c0_4, %c0_5] : memref<512x32xf32, #tpu.memory_space<vmem>>, vector<512x32xf32>
    %cst_6 = arith.constant dense<0.000000e+00> : vector<2x32xf32>
    %32 = tpu.matmul %30, %31, %cst_6 {dimension_numbers = #tpu.dot_dimension_numbers<[1], [0], [0], [1], [0, 0, 1, 1], [], []>} : vector<2x512xf32>, vector<512x32xf32>, vector<2x32xf32> -> vector<2x32xf32>
    %c0_7 = arith.constant 0 : index
    %c0_8 = arith.constant 0 : index
    %33 = vector.load %arg5[%c0_7, %c0_8] : memref<1x32xf32, #tpu.memory_space<vmem>>, vector<1x32xf32>
    %34 = vector.broadcast %33 : vector<1x32xf32> to vector<2x32xf32>
    %35 = arith.addf %32, %34 : vector<2x32xf32>
    %c0_9 = arith.constant 0 : index
    %c0_10 = arith.constant 0 : index
    %36 = vector.load %arg7[%c0_9, %c0_10] : memref<2x32xf32, #tpu.memory_space<vmem>>, vector<2x32xf32>
    tpu.vector_store %arg7[%c0_9, %c0_10], %35 {strides = array<i32>} : memref<2x32xf32, #tpu.memory_space<vmem>>, vector<2x32xf32>,
    %37 = arith.mulf %35, %35 : vector<2x32xf32>
    %cst_11 = arith.constant dense<0.000000e+00> : vector<2xf32>
    %38 = vector.multi_reduction <add>, %37, %cst_11 [1] : vector<2x32xf32> to vector<2xf32>
    %39 = vector.shape_cast %38 : vector<2xf32> to vector<2x1xf32>
    %cst_12 = arith.constant 1.000000e-24 : f32
    %40 = vector.broadcast %cst_12 : f32 to vector<2x1xf32>
    %41 = arith.maximumf %39, %40 : vector<2x1xf32>
    %42 = math.rsqrt %41 : vector<2x1xf32>
    %43 = vector.broadcast %42 : vector<2x1xf32> to vector<2x32xf32>
    %44 = arith.mulf %35, %43 : vector<2x32xf32>
    %c0_13 = arith.constant 0 : index
    %c0_14 = arith.constant 0 : index
    %45 = vector.load %arg6[%c0_13, %c0_14] : memref<10x32xf32, #tpu.memory_space<vmem>>, vector<10x32xf32>
    %46 = arith.mulf %45, %45 : vector<10x32xf32>
    %cst_15 = arith.constant dense<0.000000e+00> : vector<10xf32>
    %47 = vector.multi_reduction <add>, %46, %cst_15 [1] : vector<10x32xf32> to vector<10xf32>
    %48 = vector.shape_cast %47 : vector<10xf32> to vector<10x1xf32>
    %cst_16 = arith.constant 1.000000e-24 : f32
    %49 = vector.broadcast %cst_16 : f32 to vector<10x1xf32>
    %50 = arith.maximumf %48, %49 : vector<10x1xf32>
    %51 = math.rsqrt %50 : vector<10x1xf32>
    %52 = vector.broadcast %51 : vector<10x1xf32> to vector<10x32xf32>
    %53 = arith.mulf %45, %52 : vector<10x32xf32>
    %c0_17 = arith.constant 0 : index
    %c0_18 = arith.constant 0 : index
    %54 = vector.load %arg10[%c0_17, %c0_18] : memref<10x32xf32, #tpu.memory_space<vmem>>, vector<10x32xf32>
    tpu.vector_store %arg10[%c0_17, %c0_18], %53 {strides = array<i32>} : memref<10x32xf32, #tpu.memory_space<vmem>>, vector<10x32xf32>,
    %cst_19 = arith.constant dense<0.000000e+00> : vector<2x10xf32>
    %55 = tpu.matmul %44, %53, %cst_19 {dimension_numbers = #tpu.dot_dimension_numbers<[1], [1], [0], [0], [0, 0, 1, 0], [], []>} : vector<2x32xf32>, vector<10x32xf32>, vector<2x10xf32> -> vector<2x10xf32>
    %56 = tpu.iota {dimensions = array<i32: 1>} : vector<2x10xi32>
    %57 = tpu.iota {dimensions = array<i32: 0>} : vector<2x10xi32>
    %c0_20 = arith.constant 0 : index
    %58 = memref.load %arg1[%c0_20] : memref<2xi32, #tpu.memory_space<smem>>
    %59 = vector.broadcast %58 : i32 to vector<2x10xi32>
    %c1_i32 = arith.constant 1 : i32
    %60 = vector.broadcast %c1_i32 : i32 to vector<2x10xi32>
    %61 = arith.cmpi eq, %57, %60 : vector<2x10xi32>
    %c1 = arith.constant 1 : index
    %62 = memref.load %arg1[%c1] : memref<2xi32, #tpu.memory_space<smem>>
    %63 = vector.broadcast %62 : i32 to vector<2x10xi32>
    %64 = arith.select %61, %63, %59 : vector<2x10xi1>, vector<2x10xi32>
    %cst_21 = arith.constant 1.600000e+01 : f32
    %65 = vector.broadcast %cst_21 : f32 to vector<2x10xf32>
    %66 = arith.mulf %65, %55 : vector<2x10xf32>
    %c0_22 = arith.constant 0 : index
    %c0_23 = arith.constant 0 : index
    %67 = vector.load %arg8[%c0_22, %c0_23] : memref<2x10xf32, #tpu.memory_space<vmem>>, vector<2x10xf32>
    tpu.vector_store %arg8[%c0_22, %c0_23], %66 {strides = array<i32>} : memref<2x10xf32, #tpu.memory_space<vmem>>, vector<2x10xf32>,
    %68 = arith.cmpi eq, %56, %64 : vector<2x10xi32>
    %cst_24 = arith.constant 5.600000e+00 : f32
    %69 = vector.broadcast %cst_24 : f32 to vector<2x10xf32>
    %70 = arith.subf %66, %69 : vector<2x10xf32>
    %71 = arith.select %68, %70, %66 : vector<2x10xi1>, vector<2x10xf32>
    %c0_25 = arith.constant 0 : index
    %c0_26 = arith.constant 0 : index
    %72 = vector.load %arg9[%c0_25, %c0_26] : memref<2x10xf32, #tpu.memory_space<vmem>>, vector<2x10xf32>
    tpu.vector_store %arg9[%c0_25, %c0_26], %71 {strides = array<i32>} : memref<2x10xf32, #tpu.memory_space<vmem>>, vector<2x10xf32>,
    return
  }
  func.func @transform_0(%arg0: i32, %arg1: memref<2xi32, #tpu.memory_space<smem>>) -> (i32, i32) {
    %c0_i32 = arith.constant 0 : i32
    %c0_i32_0 = arith.constant 0 : i32
    %c0_i32_1 = arith.constant 0 : i32
    return %c0_i32, %c0_i32_0 : i32, i32
  }
  func.func @transform_1(%arg0: i32, %arg1: memref<2xi32, #tpu.memory_space<smem>>) -> (i32, i32) {
    %c0_i32 = arith.constant 0 : i32
    %c0_i32_0 = arith.constant 0 : i32
    %c0_i32_1 = arith.constant 0 : i32
    return %c0_i32, %c0_i32_0 : i32, i32
  }
  func.func @transform_2(%arg0: i32, %arg1: memref<2xi32, #tpu.memory_space<smem>>) -> (i32, i32) {
    %c0_i32 = arith.constant 0 : i32
    %c0_i32_0 = arith.constant 0 : i32
    %c0_i32_1 = arith.constant 0 : i32
    return %c0_i32, %c0_i32_0 : i32, i32
  }
  func.func @transform_3(%arg0: i32, %arg1: memref<2xi32, #tpu.memory_space<smem>>) -> (i32, i32) {
    %c0_i32 = arith.constant 0 : i32
    %c0_i32_0 = arith.constant 0 : i32
    %c0_i32_1 = arith.constant 0 : i32
    return %c0_i32, %c0_i32_0 : i32, i32
  }
  func.func @transform_4(%arg0: i32, %arg1: memref<2xi32, #tpu.memory_space<smem>>) -> (i32, i32) {
    %c0_i32 = arith.constant 0 : i32
    %c0_i32_0 = arith.constant 0 : i32
    %c0_i32_1 = arith.constant 0 : i32
    return %c0_i32, %c0_i32_0 : i32, i32
  }
  func.func @transform_5(%arg0: i32, %arg1: memref<2xi32, #tpu.memory_space<smem>>) -> (i32, i32) {
    %c0_i32 = arith.constant 0 : i32
    %c0_i32_0 = arith.constant 0 : i32
    %c0_i32_1 = arith.constant 0 : i32
    return %c0_i32, %c0_i32_0 : i32, i32
  }
  func.func @transform_6(%arg0: i32, %arg1: memref<2xi32, #tpu.memory_space<smem>>) -> (i32, i32) {
    %c0_i32 = arith.constant 0 : i32
    %c0_i32_0 = arith.constant 0 : i32
    %c0_i32_1 = arith.constant 0 : i32
    return %c0_i32, %c0_i32_0 : i32, i32
  }
  func.func @transform_7(%arg0: i32, %arg1: memref<2xi32, #tpu.memory_space<smem>>) -> (i32, i32) {
    %c0_i32 = arith.constant 0 : i32
    %c0_i32_0 = arith.constant 0 : i32
    %c0_i32_1 = arith.constant 0 : i32
    return %c0_i32, %c0_i32_0 : i32, i32
  }
  func.func @transform_8(%arg0: i32, %arg1: memref<2xi32, #tpu.memory_space<smem>>) -> (i32, i32) {
    %c0_i32 = arith.constant 0 : i32
    %c0_i32_0 = arith.constant 0 : i32
    %c0_i32_1 = arith.constant 0 : i32
    return %c0_i32, %c0_i32_0 : i32, i32
  }
}

</mosaic_0001>

<llo_original>
// kernel: training_model_forward.1
$region0: #{training_model_forward.1}
  #allocation0 [shape = 'u32[]', space=smem, size = 0x4, offset = 0x4, fixed_abs, tag = 'smem constant byte address 0x4 - core index']
  #allocation1 [shape = 'u32[144,128]{1,0:T(1,128)}', space=vmem, size = 0x12000, scoped, tag = 'internal scratch']
  #allocation2 [shape = 's32[1]{0}', space=sflag, size = 0x4, scoped, tag = 'scoped memory for training_model_forward.1']
  #allocation3 [shape = 'u8[512]{0}', space=smem, size = 0x200, scoped, tag = 'prefetched SMEM operand 0']
  %s0 = inlined_call_operand.vmem [shape: s32[2], index: 0, kind: input, shape index: {}]
  %s1 = inlined_call_operand.vmem [shape: f32[16,512], index: 1, kind: input, shape index: {}]
  %s2 = inlined_call_operand.vmem [shape: f32[8,16], index: 2, kind: input, shape index: {}]
  %s3 = inlined_call_operand.vmem [shape: f32[512,32], index: 3, kind: input, shape index: {}]
  %s4 = inlined_call_operand.vmem [shape: f32[1,32], index: 4, kind: input, shape index: {}]
  %s5 = inlined_call_operand.vmem [shape: f32[10,32], index: 5, kind: input, shape index: {}]
  %s6 = inlined_call_operand.hbm [shape: f32[2,32], index: 6, kind: output, shape index: {0}]
  %s7 = inlined_call_operand.hbm [shape: f32[2,10], index: 7, kind: output, shape index: {1}]
  %s8 = inlined_call_operand.hbm [shape: f32[2,10], index: 8, kind: output, shape index: {2}]
  %s9 = inlined_call_operand.hbm [shape: f32[10,32], index: 9, kind: output, shape index: {3}]
  %10 = xla_tuple %s6, %s7, %s8, %s9
  %s11 = sld [smem:[#allocation0]]
  $region54: #{training_model_forward.1} parent=0
    _
  %s13 = ssub.s32 1, %s11
  %s14 = scalar_select 0, %s13, %s11
  %s15 = sshll.u32 %s0, 4
  %s16 = int_to_ptr.vmem [resolvable:$true] %s15
  %18 = dma.vmem_to_smem %s16, 16, [#allocation3], [#allocation2]
  %19 = dma.done [#allocation2], 16
  %20 = sfence
  $region1: #{training_model_forward.1} parent=0
    #allocation4 [shape = 'u8[1024]{0}', space=vmem, size = 0x400, scoped, tag = 'output window, operand 0, single buffered']
    #allocation5 [shape = 's32[1]{0}', space=sflag, size = 0x4, scoped, tag = 'scoped memory for training_model_forward.1']
    #allocation6 [shape = 'u8[1024]{0}', space=vmem, size = 0x400, scoped, tag = 'output window, operand 1, single buffered']
    #allocation7 [shape = 's32[1]{0}', space=sflag, size = 0x4, scoped, tag = 'scoped memory for training_model_forward.1']
    #allocation8 [shape = 'u8[1024]{0}', space=vmem, size = 0x400, scoped, tag = 'output window, operand 2, single buffered']
    #allocation9 [shape = 'u8[8192]{0}', space=vmem, size = 0x2000, scoped, tag = 'output window, operand 3, single buffered']
    #allocation10 [shape = 's32[1]{0}', space=sflag, size = 0x4, scoped, tag = 'scoped memory for training_model_forward.1']
    %21 = vsyncpa [#allocation5], 0
    %22 = vsyncpa [#allocation7], 0
    %23 = vsyncpa [#allocation10], 0
    // Predicated region
    $region2: #{training_model_forward.1} parent=1 // pred_check
      _
    $region3: #{training_model_forward.1} parent=1 // pred_check_branch
      %25 = sbr.rel (0) target = $region5
    $region4: #{training_model_forward.1} parent=1 // pred_region
      _
    $region5: #{training_model_forward.1} parent=1 // pred_fallthru
      _
    // Predicated region
    $region6: #{training_model_forward.1} parent=1 // pred_check
      _
    $region7: #{training_model_forward.1} parent=1 // pred_check_branch
      %27 = sbr.rel (0) target = $region9
    $region8: #{training_model_forward.1} parent=1 // pred_region
      _
    $region9: #{training_model_forward.1} parent=1 // pred_fallthru
      _
    // Predicated region
    $region10: #{training_model_forward.1} parent=1 // pred_check
      _
    $region11: #{training_model_forward.1} parent=1 // pred_check_branch
      %29 = sbr.rel (0) target = $region13
    $region12: #{training_model_forward.1} parent=1 // pred_region
      _
    $region13: #{training_model_forward.1} parent=1 // pred_fallthru
      _
    // Predicated region
    $region14: #{training_model_forward.1} parent=1 // pred_check
      _
    $region15: #{training_model_forward.1} parent=1 // pred_check_branch
      %31 = sbr.rel (0) target = $region17
    $region16: #{training_model_forward.1} parent=1 // pred_region
      _
    $region17: #{training_model_forward.1} parent=1 // pred_fallthru
      _
    // Predicated region
    $region18: #{training_model_forward.1} parent=1 // pred_check
      _
    $region19: #{training_model_forward.1} parent=1 // pred_check_branch
      %33 = sbr.rel (0) target = $region21
    $region20: #{training_model_forward.1} parent=1 // pred_region
      _
    $region21: #{training_model_forward.1} parent=1 // pred_fallthru
      _
    %v34 = vld [vmem:[%s2] sm:$0xff]
    %v35 = vld [vmem:[%s1] sm:$0xff]
    %v36 = vld [vmem:[%s1 + $0x8] sm:$0xff]
    %v37 = vld [vmem:[%s1 + $0x10] sm:$0xff]
    %v38 = vld [vmem:[%s1 + $0x18] sm:$0xff]
    %v39 = vld [vmem:[%s1 + $0x20] sm:$0xff]
    %v40 = vld [vmem:[%s1 + $0x28] sm:$0xff]
    %v41 = vld [vmem:[%s1 + $0x30] sm:$0xff]
    %v42 = vld [vmem:[%s1 + $0x38] sm:$0xff]
    %vm43 = vcmask 130048
    %v45 = vsel %vm43, %v34, 0
    %47 = vmatprep.subr.mxu0 %v36
    %48 = vmatpush1.msra.mxu0 %v35
    %49 = vmatprep.subr.mxu0 %v40
    %50 = vmatpush1.msra.mxu0 %v39
    %51 = vmatprep.subr.mxu0 0.0
    %52 = vmatpush1.msra.mxu0 0.0
    %53 = vmatprep.subr.mxu0 0.0
    %54 = vmatpush1.msra.mxu0 0.0
    %55 = vmatprep.subr.mxu0 0.0
    %56 = vmatpush1.msra.mxu0 0.0
    %57 = vmatprep.subr.mxu0 0.0
    %58 = vmatpush1.msra.mxu0 0.0
    %59 = vmatprep.subr.mxu0 0.0
    %60 = vmatpush1.msra.mxu0 0.0
    %61 = vmatprep.subr.mxu0 0.0
    %62 = vmatpush1.msra.mxu0 0.0
    %63 = vmatprep.subr.mxu0 0.0
    %64 = vmatpush1.msra.mxu0 0.0
    %65 = vmatprep.subr.mxu0 0.0
    %66 = vmatpush1.msra.mxu0 0.0
    %67 = vmatprep.subr.mxu0 0.0
    %68 = vmatpush1.msra.mxu0 0.0
    %69 = vmatprep.subr.mxu0 0.0
    %70 = vmatpush1.msra.mxu0 0.0
    %71 = vmatprep.subr.mxu0 0.0
    %72 = vmatpush1.msra.mxu0 0.0
    %73 = vmatprep.subr.mxu0 0.0
    %74 = vmatpush1.msra.mxu0 0.0
    %75 = vmatprep.subr.mxu0 0.0
    %76 = vmatpush1.msra.mxu0 0.0
    %77 = vmatprep.subr.mxu0 0.0
    %78 = vmatpush1.msra.mxu0 0.0
    %79 = vmatprep.subr.mxu0 0.0
    %80 = vmatpush1.msra.mxu0 0.0
    %81 = vmatprep.subr.mxu0 0.0
    %82 = vmatpush1.msra.mxu0 0.0
    %83 = vmatprep.subr.mxu0 0.0
    %84 = vmatpush1.msra.mxu0 0.0
    %85 = vmatprep.subr.mxu0 0.0
    %86 = vmatpush1.msra.mxu0 0.0
    %87 = vmatprep.subr.mxu0 0.0
    %88 = vmatpush1.msra.mxu0 0.0
    %89 = vmatprep.subr.mxu0 0.0
    %90 = vmatpush1.msra.mxu0 0.0
    %91 = vmatprep.subr.mxu0 0.0
    %92 = vmatpush1.msra.mxu0 0.0
    %93 = vmatprep.subr.mxu0 0.0
    %94 = vmatpush1.msra.mxu0 0.0
    %95 = vmatprep.subr.mxu0 0.0
    %96 = vmatpush1.msra.mxu0 0.0
    %97 = vmatprep.subr.mxu0 0.0
    %98 = vmatpush1.msra.mxu0 0.0
    %99 = vmatprep.subr.mxu0 0.0
    %100 = vmatpush1.msra.mxu0 0.0
    %101 = vmatprep.subr.mxu0 0.0
    %102 = vmatpush1.msra.mxu0 0.0
    %103 = vmatprep.subr.mxu0 0.0
    %104 = vmatpush1.msra.mxu0 0.0
    %105 = vmatprep.subr.mxu0 0.0
    %106 = vmatpush1.msra.mxu0 0.0
    %107 = vmatprep.subr.mxu0 0.0
    %108 = vmatpush1.msra.mxu0 0.0
    %109 = vmatprep.subr.mxu0 0.0
    %110 = vmatpush1.msra.mxu0 0.0
    %111 = vmatprep.mubr.f32.mxu0 0.0
    %112 = vmatmul.mubr.f32.gmra.mrb[0].mxu0 %v45
    %v113 = vpop.f32.mrb[0].mxu0
    %v114 = vadd.f32 0.0, %v113
    %v115 = vpop.f32.mrb[0].mxu0
    %v116 = vadd.f32 0.0, %v115
    %117 = vdwg.mxu0
    %118 = vmatprep.subr.mxu0 %v38
    %119 = vmatpush1.msra.mxu0 %v37
    %120 = vmatprep.subr.mxu0 %v42
    %121 = vmatpush1.msra.mxu0 %v41
    %122 = vmatprep.subr.mxu0 0.0
    %123 = vmatpush1.msra.mxu0 0.0
    %124 = vmatprep.subr.mxu0 0.0
    %125 = vmatpush1.msra.mxu0 0.0
    %126 = vmatprep.subr.mxu0 0.0
    %127 = vmatpush1.msra.mxu0 0.0
    %128 = vmatprep.subr.mxu0 0.0
    %129 = vmatpush1.msra.mxu0 0.0
    %130 = vmatprep.subr.mxu0 0.0
    %131 = vmatpush1.msra.mxu0 0.0
    %132 = vmatprep.subr.mxu0 0.0
    %133 = vmatpush1.msra.mxu0 0.0
    %134 = vmatprep.subr.mxu0 0.0
    %135 = vmatpush1.msra.mxu0 0.0
    %136 = vmatprep.subr.mxu0 0.0
    %137 = vmatpush1.msra.mxu0 0.0
    %138 = vmatprep.subr.mxu0 0.0
    %139 = vmatpush1.msra.mxu0 0.0
    %140 = vmatprep.subr.mxu0 0.0
    %141 = vmatpush1.msra.mxu0 0.0
    %142 = vmatprep.subr.mxu0 0.0
    %143 = vmatpush1.msra.mxu0 0.0
    %144 = vmatprep.subr.mxu0 0.0
    %145 = vmatpush1.msra.mxu0 0.0
    %146 = vmatprep.subr.mxu0 0.0
    %147 = vmatpush1.msra.mxu0 0.0
    %148 = vmatprep.subr.mxu0 0.0
    %149 = vmatpush1.msra.mxu0 0.0
    %150 = vmatprep.subr.mxu0 0.0
    %151 = vmatpush1.msra.mxu0 0.0
    %152 = vmatprep.subr.mxu0 0.0
    %153 = vmatpush1.msra.mxu0 0.0
    %154 = vmatprep.subr.mxu0 0.0
    %155 = vmatpush1.msra.mxu0 0.0
    %156 = vmatprep.subr.mxu0 0.0
    %157 = vmatpush1.msra.mxu0 0.0
    %158 = vmatprep.subr.mxu0 0.0
    %159 = vmatpush1.msra.mxu0 0.0
    %160 = vmatprep.subr.mxu0 0.0
    %161 = vmatpush1.msra.mxu0 0.0
    %162 = vmatprep.subr.mxu0 0.0
    %163 = vmatpush1.msra.mxu0 0.0
    %164 = vmatprep.subr.mxu0 0.0
    %165 = vmatpush1.msra.mxu0 0.0
    %166 = vmatprep.subr.mxu0 0.0
    %167 = vmatpush1.msra.mxu0 0.0
    %168 = vmatprep.subr.mxu0 0.0
    %169 = vmatpush1.msra.mxu0 0.0
    %170 = vmatprep.subr.mxu0 0.0
    %171 = vmatpush1.msra.mxu0 0.0
    %172 = vmatprep.subr.mxu0 0.0
    %173 = vmatpush1.msra.mxu0 0.0
    %174 = vmatprep.subr.mxu0 0.0
    %175 = vmatpush1.msra.mxu0 0.0
    %176 = vmatprep.subr.mxu0 0.0
    %177 = vmatpush1.msra.mxu0 0.0
    %178 = vmatprep.subr.mxu0 0.0
    %179 = vmatpush1.msra.mxu0 0.0
    %180 = vmatprep.subr.mxu0 0.0
    %181 = vmatpush1.msra.mxu0 0.0
    %182 = vmatprep.mubr.f32.mxu0 0.0
    %183 = vmatmul.mubr.f32.gmra.mrb[0].mxu0 %v45
    %v184 = vpop.f32.mrb[0].mxu0
    %v185 = vadd.f32 0.0, %v184
    %v186 = vpop.f32.mrb[0].mxu0
    %v187 = vadd.f32 0.0, %v186
    %188 = vdwg.mxu0
    %v189 = vmax.f32 %v114, 0.0
    %v190 = vmax.f32 %v116, 0.0
    %v191 = vmax.f32 %v185, 0.0
    %v192 = vmax.f32 %v187, 0.0
    %v193 = vmax.f32 %v189, %v190
    %v194 = vmax.f32 %v191, %v192
    %v195 = vmax.f32 %v193, %v194
    %v197 = vrot.slane %v195, 1
    %198 = vrot.lane.b32.xlu0 %v197, 64
    %v199 = vpop.permute.xlu0 %198
    %v201 = vrot.slane %v195, 2
    %v203 = vrot.slane %v195, 3
    %204 = vrot.lane.b32.xlu0 %v203, 64
    %v205 = vpop.permute.xlu0 %204
    %v207 = vrot.slane %v195, 4
    %v209 = vrot.slane %v195, 5
    %210 = vrot.lane.b32.xlu0 %v209, 64
    %v211 = vpop.permute.xlu0 %210
    %v213 = vrot.slane %v195, 6
    %v215 = vrot.slane %v195, 7
    %216 = vrot.lane.b32.xlu0 %v215, 64
    %v217 = vpop.permute.xlu0 %216
    %vm219 = vcmask 523264
    %v220 = vsel %vm219, %v195, %v199
    %v221 = vsel %vm219, %v201, %v205
    %v222 = vsel %vm219, %v207, %v211
    %v223 = vsel %vm219, %v213, %v217
    %224 = vrot.lane.b32.xlu0 %v195, 64
    %v225 = vpop.permute.xlu0 %224
    %228 = vrot.lane.b32.xlu0 %v201, 64
    %v229 = vpop.permute.xlu0 %228
    %232 = vrot.lane.b32.xlu0 %v207, 64
    %v233 = vpop.permute.xlu0 %232
    %236 = vrot.lane.b32.xlu0 %v213, 64
    %v237 = vpop.permute.xlu0 %236
    %v240 = vsel %vm219, %v225, %v197
    %v241 = vsel %vm219, %v229, %v203
    %v242 = vsel %vm219, %v233, %v209
    %v243 = vsel %vm219, %v237, %v215
    %v248 = vrot.slane %v240, 7
    %v249 = vrot.slane %v241, 7
    %v250 = vrot.slane %v242, 7
    %v251 = vrot.slane %v243, 7
    %vm256 = vcmask 1040384
    %v257 = vsel %vm256, %v220, %v248
    %v258 = vsel %vm256, %v221, %v249
    %v259 = vsel %vm256, %v222, %v250
    %v260 = vsel %vm256, %v223, %v251
    %v261 = vld [vmem:[%s3] sm:$0xff]
    %v262 = vld [vmem:[%s3 + $0x8] sm:$0xff]
    %v263 = vld [vmem:[%s3 + $0x10] sm:$0xff]
    %v264 = vld [vmem:[%s3 + $0x18] sm:$0xff]
    %v265 = vld [vmem:[%s3 + $0x20] sm:$0xff]
    %v266 = vld [vmem:[%s3 + $0x28] sm:$0xff]
    %v267 = vld [vmem:[%s3 + $0x30] sm:$0xff]
    %v268 = vld [vmem:[%s3 + $0x38] sm:$0xff]
    %v269 = vld [vmem:[%s3 + $0x40] sm:$0xff]
    %v270 = vld [vmem:[%s3 + $0x48] sm:$0xff]
    %v271 = vld [vmem:[%s3 + $0x50] sm:$0xff]
    %v272 = vld [vmem:[%s3 + $0x58] sm:$0xff]
    %v273 = vld [vmem:[%s3 + $0x60] sm:$0xff]
    %v274 = vld [vmem:[%s3 + $0x68] sm:$0xff]
    %v275 = vld [vmem:[%s3 + $0x70] sm:$0xff]
    %v276 = vld [vmem:[%s3 + $0x78] sm:$0xff]
    %v277 = vld [vmem:[%s3 + $0x80] sm:$0xff]
    %v278 = vld [vmem:[%s3 + $0x88] sm:$0xff]
    %v279 = vld [vmem:[%s3 + $0x90] sm:$0xff]
    %v280 = vld [vmem:[%s3 + $0x98] sm:$0xff]
    %v281 = vld [vmem:[%s3 + $0xa0] sm:$0xff]
    %v282 = vld [vmem:[%s3 + $0xa8] sm:$0xff]
    %v283 = vld [vmem:[%s3 + $0xb0] sm:$0xff]
    %v284 = vld [vmem:[%s3 + $0xb8] sm:$0xff]
    %v285 = vld [vmem:[%s3 + $0xc0] sm:$0xff]
    %v286 = vld [vmem:[%s3 + $0xc8] sm:$0xff]
    %v287 = vld [vmem:[%s3 + $0xd0] sm:$0xff]
    %v288 = vld [vmem:[%s3 + $0xd8] sm:$0xff]
    %v289 = vld [vmem:[%s3 + $0xe0] sm:$0xff]
    %v290 = vld [vmem:[%s3 + $0xe8] sm:$0xff]
    %v291 = vld [vmem:[%s3 + $0xf0] sm:$0xff]
    %v292 = vld [vmem:[%s3 + $0xf8] sm:$0xff]
    %v293 = vld [vmem:[%s3 + $0x100] sm:$0xff]
    %v294 = vld [vmem:[%s3 + $0x108] sm:$0xff]
    %v295 = vld [vmem:[%s3 + $0x110] sm:$0xff]
    %v296 = vld [vmem:[%s3 + $0x118] sm:$0xff]
    %v297 = vld [vmem:[%s3 + $0x120] sm:$0xff]
    %v298 = vld [vmem:[%s3 + $0x128] sm:$0xff]
    %v299 = vld [vmem:[%s3 + $0x130] sm:$0xff]
    %v300 = vld [vmem:[%s3 + $0x138] sm:$0xff]
    %v301 = vld [vmem:[%s3 + $0x140] sm:$0xff]
    %v302 = vld [vmem:[%s3 + $0x148] sm:$0xff]
    %v303 = vld [vmem:[%s3 + $0x150] sm:$0xff]
    %v304 = vld [vmem:[%s3 + $0x158] sm:$0xff]
    %v305 = vld [vmem:[%s3 + $0x160] sm:$0xff]
    %v306 = vld [vmem:[%s3 + $0x168] sm:$0xff]
    %v307 = vld [vmem:[%s3 + $0x170] sm:$0xff]
    %v308 = vld [vmem:[%s3 + $0x178] sm:$0xff]
    %v309 = vld [vmem:[%s3 + $0x180] sm:$0xff]
    %v310 = vld [vmem:[%s3 + $0x188] sm:$0xff]
    %v311 = vld [vmem:[%s3 + $0x190] sm:$0xff]
    %v312 = vld [vmem:[%s3 + $0x198] sm:$0xff]
    %v313 = vld [vmem:[%s3 + $0x1a0] sm:$0xff]
    %v314 = vld [vmem:[%s3 + $0x1a8] sm:$0xff]
    %v315 = vld [vmem:[%s3 + $0x1b0] sm:$0xff]
    %v316 = vld [vmem:[%s3 + $0x1b8] sm:$0xff]
    %v317 = vld [vmem:[%s3 + $0x1c0] sm:$0xff]
    %v318 = vld [vmem:[%s3 + $0x1c8] sm:$0xff]
    %v319 = vld [vmem:[%s3 + $0x1d0] sm:$0xff]
    %v320 = vld [vmem:[%s3 + $0x1d8] sm:$0xff]
    %v321 = vld [vmem:[%s3 + $0x1e0] sm:$0xff]
    %v322 = vld [vmem:[%s3 + $0x1e8] sm:$0xff]
    %v323 = vld [vmem:[%s3 + $0x1f0] sm:$0xff]
    %v324 = vld [vmem:[%s3 + $0x1f8] sm:$0xff]
    %v325 = vld [vmem:[%s4] sm:$0x1]
    %v327 = vlaneseq
    %v328 = vshrl.u32 %v327, 7
    %v329 = vsub.s32 0, %v328
    %v330 = vrot.slane %v325, %v329
    %332 = vmatprep.subr.mxu0 0.0
    %333 = vmatpush1.msra.mxu0 %v261
    %334 = vmatprep.subr.mxu0 0.0
    %335 = vmatpush1.msra.mxu0 %v262
    %336 = vmatprep.subr.mxu0 0.0
    %337 = vmatpush1.msra.mxu0 %v263
    %338 = vmatprep.subr.mxu0 0.0
    %339 = vmatpush1.msra.mxu0 %v264
    %340 = vmatprep.subr.mxu0 0.0
    %341 = vmatpush1.msra.mxu0 %v265
    %342 = vmatprep.subr.mxu0 0.0
    %343 = vmatpush1.msra.mxu0 %v266
    %344 = vmatprep.subr.mxu0 0.0
    %345 = vmatpush1.msra.mxu0 %v267
    %346 = vmatprep.subr.mxu0 0.0
    %347 = vmatpush1.msra.mxu0 %v268
    %348 = vmatprep.subr.mxu0 0.0
    %349 = vmatpush1.msra.mxu0 %v269
    %350 = vmatprep.subr.mxu0 0.0
    %351 = vmatpush1.msra.mxu0 %v270
    %352 = vmatprep.subr.mxu0 0.0
    %353 = vmatpush1.msra.mxu0 %v271
    %354 = vmatprep.subr.mxu0 0.0
    %355 = vmatpush1.msra.mxu0 %v272
    %356 = vmatprep.subr.mxu0 0.0
    %357 = vmatpush1.msra.mxu0 %v273
    %358 = vmatprep.subr.mxu0 0.0
    %359 = vmatpush1.msra.mxu0 %v274
    %360 = vmatprep.subr.mxu0 0.0
    %361 = vmatpush1.msra.mxu0 %v275
    %362 = vmatprep.subr.mxu0 0.0
    %363 = vmatpush1.msra.mxu0 %v276
    %364 = vmatprep.subr.mxu0 0.0
    %365 = vmatpush1.msra.mxu0 %v277
    %366 = vmatprep.subr.mxu0 0.0
    %367 = vmatpush1.msra.mxu0 %v278
    %368 = vmatprep.subr.mxu0 0.0
    %369 = vmatpush1.msra.mxu0 %v279
    %370 = vmatprep.subr.mxu0 0.0
    %371 = vmatpush1.msra.mxu0 %v280
    %372 = vmatprep.subr.mxu0 0.0
    %373 = vmatpush1.msra.mxu0 %v281
    %374 = vmatprep.subr.mxu0 0.0
    %375 = vmatpush1.msra.mxu0 %v282
    %376 = vmatprep.subr.mxu0 0.0
    %377 = vmatpush1.msra.mxu0 %v283
    %378 = vmatprep.subr.mxu0 0.0
    %379 = vmatpush1.msra.mxu0 %v284
    %380 = vmatprep.subr.mxu0 0.0
    %381 = vmatpush1.msra.mxu0 %v285
    %382 = vmatprep.subr.mxu0 0.0
    %383 = vmatpush1.msra.mxu0 %v286
    %384 = vmatprep.subr.mxu0 0.0
    %385 = vmatpush1.msra.mxu0 %v287
    %386 = vmatprep.subr.mxu0 0.0
    %387 = vmatpush1.msra.mxu0 %v288
    %388 = vmatprep.subr.mxu0 0.0
    %389 = vmatpush1.msra.mxu0 %v289
    %390 = vmatprep.subr.mxu0 0.0
    %391 = vmatpush1.msra.mxu0 %v290
    %392 = vmatprep.subr.mxu0 0.0
    %393 = vmatpush1.msra.mxu0 %v291
    %394 = vmatprep.subr.mxu0 0.0
    %395 = vmatpush1.msra.mxu0 %v292
    %396 = vmatprep.mubr.f32.mxu0 %v258
    %397 = vmatmul.mubr.f32.gmra.mrb[0].mxu0 %v257
    %v398 = vpop.f32.mrb[0].mxu0
    %v399 = vadd.f32 %v330, %v398
    %v400 = vpop.f32.mrb[0].mxu0
    %401 = vdwg.mxu0
    %402 = vmatprep.subr.mxu0 0.0
    %403 = vmatpush1.msra.mxu0 %v293
    %404 = vmatprep.subr.mxu0 0.0
    %405 = vmatpush1.msra.mxu0 %v294
    %406 = vmatprep.subr.mxu0 0.0
    %407 = vmatpush1.msra.mxu0 %v295
    %408 = vmatprep.subr.mxu0 0.0
    %409 = vmatpush1.msra.mxu0 %v296
    %410 = vmatprep.subr.mxu0 0.0
    %411 = vmatpush1.msra.mxu0 %v297
    %412 = vmatprep.subr.mxu0 0.0
    %413 = vmatpush1.msra.mxu0 %v298
    %414 = vmatprep.subr.mxu0 0.0
    %415 = vmatpush1.msra.mxu0 %v299
    %416 = vmatprep.subr.mxu0 0.0
    %417 = vmatpush1.msra.mxu0 %v300
    %418 = vmatprep.subr.mxu0 0.0
    %419 = vmatpush1.msra.mxu0 %v301
    %420 = vmatprep.subr.mxu0 0.0
    %421 = vmatpush1.msra.mxu0 %v302
    %422 = vmatprep.subr.mxu0 0.0
    %423 = vmatpush1.msra.mxu0 %v303
    %424 = vmatprep.subr.mxu0 0.0
    %425 = vmatpush1.msra.mxu0 %v304
    %426 = vmatprep.subr.mxu0 0.0
    %427 = vmatpush1.msra.mxu0 %v305
    %428 = vmatprep.subr.mxu0 0.0
    %429 = vmatpush1.msra.mxu0 %v306
    %430 = vmatprep.subr.mxu0 0.0
    %431 = vmatpush1.msra.mxu0 %v307
    %432 = vmatprep.subr.mxu0 0.0
    %433 = vmatpush1.msra.mxu0 %v308
    %434 = vmatprep.subr.mxu0 0.0
    %435 = vmatpush1.msra.mxu0 %v309
    %436 = vmatprep.subr.mxu0 0.0
    %437 = vmatpush1.msra.mxu0 %v310
    %438 = vmatprep.subr.mxu0 0.0
    %439 = vmatpush1.msra.mxu0 %v311
    %440 = vmatprep.subr.mxu0 0.0
    %441 = vmatpush1.msra.mxu0 %v312
    %442 = vmatprep.subr.mxu0 0.0
    %443 = vmatpush1.msra.mxu0 %v313
    %444 = vmatprep.subr.mxu0 0.0
    %445 = vmatpush1.msra.mxu0 %v314
    %446 = vmatprep.subr.mxu0 0.0
    %447 = vmatpush1.msra.mxu0 %v315
    %448 = vmatprep.subr.mxu0 0.0
    %449 = vmatpush1.msra.mxu0 %v316
    %450 = vmatprep.subr.mxu0 0.0
    %451 = vmatpush1.msra.mxu0 %v317
    %452 = vmatprep.subr.mxu0 0.0
    %453 = vmatpush1.msra.mxu0 %v318
    %454 = vmatprep.subr.mxu0 0.0
    %455 = vmatpush1.msra.mxu0 %v319
    %456 = vmatprep.subr.mxu0 0.0
    %457 = vmatpush1.msra.mxu0 %v320
    %458 = vmatprep.subr.mxu0 0.0
    %459 = vmatpush1.msra.mxu0 %v321
    %460 = vmatprep.subr.mxu0 0.0
    %461 = vmatpush1.msra.mxu0 %v322
    %462 = vmatprep.subr.mxu0 0.0
    %463 = vmatpush1.msra.mxu0 %v323
    %464 = vmatprep.subr.mxu0 0.0
    %465 = vmatpush1.msra.mxu0 %v324
    %466 = vmatprep.mubr.f32.mxu0 %v260
    %467 = vmatmul.mubr.f32.gmra.mrb[0].mxu0 %v259
    %v468 = vpop.f32.mrb[0].mxu0
    %v469 = vadd.f32 %v399, %v468
    %v470 = vpop.f32.mrb[0].mxu0
    %471 = vdwg.mxu0
    %vm472 = vcmask 254976
    %473 = vst.msk [vmem:[#allocation4] sm:$0x3] %vm472, %v469
    %v474 = vmul.f32 %v469, %v469
    %v475 = vsel %vm472, %v474, 0.0
    %476 = vadd.xlane.f32.xlu0 %v475
    %v477 = vpop.xlane.xlu0 %476
    %v478 = vmax.f32 %v477, 1e-24
    %v479 = vrsqrt.pop %v478
    %v480 = vmul.f32 %v469, %v479
    %v481 = vld [vmem:[%s5] sm:$0xff]
    %v482 = vld [vmem:[%s5 + $0x8] sm:$0x3]
    %v483 = vmul.f32 %v481, %v481
    %v484 = vmul.f32 %v482, %v482
    %vm485 = vcmask 261120
    %v486 = vsel %vm485, %v483, 0.0
    %487 = vadd.xlane.f32.xlu0 %v486
    %v488 = vpop.xlane.xlu0 %487
    %v489 = vsel %vm472, %v484, 0.0
    %490 = vadd.xlane.f32.xlu0 %v489
    %v491 = vpop.xlane.xlu0 %490
    %v492 = vmax.f32 %v488, 1e-24
    %v493 = vmax.f32 %v491, 1e-24
    %v494 = vrsqrt.pop %v492
    %v495 = vrsqrt.pop %v493
    %v496 = vmul.f32 %v481, %v494
    %v497 = vmul.f32 %v482, %v495
    %498 = vst.msk [vmem:[#allocation9] sm:$0xff] %vm485, %v496
    %499 = vst.msk [vmem:[#allocation9 + $0x8] sm:$0x3] %vm472, %v497
    %v501 = vsel %vm485, %v480, 0
    %v504 = vsel %vm485, %v496, 0
    %v507 = vsel %vm485, %v497, 0
    %509 = vmatprep.subr.mxu0 0.0
    %510 = vmatpush1.xpose.msra.mxu0 %v504
    %511 = vmatprep.subr.mxu0 0.0
    %512 = vmatpush1.xpose.msra.mxu0 %v507
    %513 = vmatprep.subr.mxu0 0.0
    %514 = vmatpush1.xpose.msra.mxu0 0.0
    %515 = vmatprep.subr.mxu0 0.0
    %516 = vmatpush1.xpose.msra.mxu0 0.0
    %517 = vmatprep.subr.mxu0 0.0
    %518 = vmatpush1.xpose.msra.mxu0 0.0
    %519 = vmatprep.subr.mxu0 0.0
    %520 = vmatpush1.xpose.msra.mxu0 0.0
    %521 = vmatprep.subr.mxu0 0.0
    %522 = vmatpush1.xpose.msra.mxu0 0.0
    %523 = vmatprep.subr.mxu0 0.0
    %524 = vmatpush1.xpose.msra.mxu0 0.0
    %525 = vmatprep.subr.mxu0 0.0
    %526 = vmatpush1.xpose.msra.mxu0 0.0
    %527 = vmatprep.subr.mxu0 0.0
    %528 = vmatpush1.xpose.msra.mxu0 0.0
    %529 = vmatprep.subr.mxu0 0.0
    %530 = vmatpush1.xpose.msra.mxu0 0.0
    %531 = vmatprep.subr.mxu0 0.0
    %532 = vmatpush1.xpose.msra.mxu0 0.0
    %533 = vmatprep.subr.mxu0 0.0
    %534 = vmatpush1.xpose.msra.mxu0 0.0
    %535 = vmatprep.subr.mxu0 0.0
    %536 = vmatpush1.xpose.msra.mxu0 0.0
    %537 = vmatprep.subr.mxu0 0.0
    %538 = vmatpush1.xpose.msra.mxu0 0.0
    %539 = vmatprep.subr.mxu0 0.0
    %540 = vmatpush1.xpose.msra.mxu0 0.0
    %541 = vmatprep.subr.mxu0 0.0
    %542 = vmatpush1.xpose.msra.mxu0 0.0
    %543 = vmatprep.subr.mxu0 0.0
    %544 = vmatpush1.xpose.msra.mxu0 0.0
    %545 = vmatprep.subr.mxu0 0.0
    %546 = vmatpush1.xpose.msra.mxu0 0.0
    %547 = vmatprep.subr.mxu0 0.0
    %548 = vmatpush1.xpose.msra.mxu0 0.0
    %549 = vmatprep.subr.mxu0 0.0
    %550 = vmatpush1.xpose.msra.mxu0 0.0
    %551 = vmatprep.subr.mxu0 0.0
    %552 = vmatpush1.xpose.msra.mxu0 0.0
    %553 = vmatprep.subr.mxu0 0.0
    %554 = vmatpush1.xpose.msra.mxu0 0.0
    %555 = vmatprep.subr.mxu0 0.0
    %556 = vmatpush1.xpose.msra.mxu0 0.0
    %557 = vmatprep.subr.mxu0 0.0
    %558 = vmatpush1.xpose.msra.mxu0 0.0
    %559 = vmatprep.subr.mxu0 0.0
    %560 = vmatpush1.xpose.msra.mxu0 0.0
    %561 = vmatprep.subr.mxu0 0.0
    %562 = vmatpush1.xpose.msra.mxu0 0.0
    %563 = vmatprep.subr.mxu0 0.0
    %564 = vmatpush1.xpose.msra.mxu0 0.0
    %565 = vmatprep.subr.mxu0 0.0
    %566 = vmatpush1.xpose.msra.mxu0 0.0
    %567 = vmatprep.subr.mxu0 0.0
    %568 = vmatpush1.xpose.msra.mxu0 0.0
    %569 = vmatprep.subr.mxu0 0.0
    %570 = vmatpush1.xpose.msra.mxu0 0.0
    %571 = vmatprep.subr.mxu0 0.0
    %572 = vmatpush1.xpose.msra.mxu0 0.0
    %573 = vmatprep.mubr.f32.mxu0 0.0
    %574 = vmatmul.mubr.f32.gmra.mrb[0].mxu0 %v501
    %v575 = vpop.f32.mrb[0].mxu0
    %v576 = vadd.f32 0.0, %v575
    %v577 = vpop.f32.mrb[0].mxu0
    %578 = vdwg.mxu0
    %v579 = vlaneseq
    %v580 = vand.u32 %v579, 127
    %v581 = vlaneseq
    %v582 = vshrl.u32 %v581, 7
    %s583 = sld [smem:[#allocation3]]
    %v584 = vstv %s583
    %vm585 = vcmp.eq.s32.totalorder %v582, 1
    %s586 = sld [smem:[#allocation3 + $0x1]]
    %v587 = vstv %s586
    %v588 = vsel %vm585, %v587, %v584
    %v589 = vmul.f32 %v576, 16.0
    %vm590 = vcmask 74752
    %591 = vst.msk [vmem:[#allocation6] sm:$0x3] %vm590, %v589
    %vm592 = vcmp.eq.s32.totalorder %v580, %v588
    %v593 = vsub.f32 %v589, 5.6
    %v594 = vsel %vm592, %v593, %v589
    %595 = vst.msk [vmem:[#allocation8] sm:$0x3] %vm590, %v594
    // Predicated region
    $region22: #{training_model_forward.1} parent=1 // pred_check
      _
    $region23: #{training_model_forward.1} parent=1 // pred_check_branch
      %597 = sbr.rel (0) target = $region25
    $region24: #{training_model_forward.1} parent=1 // pred_region
      %s599 = ssub.s32 32, 32
      %600 = vsyncadd [#allocation5], %s599
      %s602 = sshll.u32 [#allocation4], 4
      %s603 = int_to_ptr.vmem [resolvable:$true] %s602
      %605 = dma.vmem_to_hbm [thread:$0]  %s603, 32, %s6, [#allocation5]
    $region25: #{training_model_forward.1} parent=1 // pred_fallthru
      _
    // Predicated region
    $region26: #{training_model_forward.1} parent=1 // pred_check
      _
    $region27: #{training_model_forward.1} parent=1 // pred_check_branch
      %607 = sbr.rel (0) target = $region29
    $region28: #{training_model_forward.1} parent=1 // pred_region
      %s609 = ssub.s32 32, 32
      %610 = vsyncadd [#allocation7], %s609
      %s612 = sshll.u32 [#allocation6], 4
      %s613 = int_to_ptr.vmem [resolvable:$true] %s612
      %615 = dma.vmem_to_hbm [thread:$0]  %s613, 32, %s7, [#allocation7]
    $region29: #{training_model_forward.1} parent=1 // pred_fallthru
      _
    // Predicated region
    $region30: #{training_model_forward.1} parent=1 // pred_check
      _
    $region31: #{training_model_forward.1} parent=1 // pred_check_branch
      %617 = sbr.rel (0) target = $region33
    $region32: #{training_model_forward.1} parent=1 // pred_region
      %s619 = ssub.s32 32, 32
      %620 = vsyncadd [#allocation7], %s619
      %s622 = sshll.u32 [#allocation8], 4
      %s623 = int_to_ptr.vmem [resolvable:$true] %s622
      %625 = dma.vmem_to_hbm [thread:$0]  %s623, 32, %s8, [#allocation7]
    $region33: #{training_model_forward.1} parent=1 // pred_fallthru
      _
    // Predicated region
    $region34: #{training_model_forward.1} parent=1 // pred_check
      _
    $region35: #{training_model_forward.1} parent=1 // pred_check_branch
      %627 = sbr.rel (0) target = $region37
    $region36: #{training_model_forward.1} parent=1 // pred_region
      %s629 = ssub.s32 256, 256
      %630 = vsyncadd [#allocation10], %s629
      %s631 = sshll.u32 [#allocation9], 4
      %s632 = int_to_ptr.vmem [resolvable:$true] %s631
      %637 = dma.vmem_to_hbm [thread:$0]  %s632, 256, %s9, [#allocation10], 128, 128, 8
    $region37: #{training_model_forward.1} parent=1 // pred_fallthru
      _
    // Predicated region
    $region38: #{training_model_forward.1} parent=1 // pred_check
      _
    $region39: #{training_model_forward.1} parent=1 // pred_check_branch
      %639 = sbr.rel (0) target = $region41
    $region40: #{training_model_forward.1} parent=1 // pred_region
      %640 = dma.done [#allocation5], 32
    $region41: #{training_model_forward.1} parent=1 // pred_fallthru
      _
    // Predicated region
    $region42: #{training_model_forward.1} parent=1 // pred_check
      _
    $region43: #{training_model_forward.1} parent=1 // pred_check_branch
      %642 = sbr.rel (0) target = $region45
    $region44: #{training_model_forward.1} parent=1 // pred_region
      %643 = dma.done [#allocation7], 32
    $region45: #{training_model_forward.1} parent=1 // pred_fallthru
      _
    // Predicated region
    $region46: #{training_model_forward.1} parent=1 // pred_check
      _
    $region47: #{training_model_forward.1} parent=1 // pred_check_branch
      %645 = sbr.rel (0) target = $region49
    $region48: #{training_model_forward.1} parent=1 // pred_region
      %646 = dma.done [#allocation7], 32
    $region49: #{training_model_forward.1} parent=1 // pred_fallthru
      _
    // Predicated region
    $region50: #{training_model_forward.1} parent=1 // pred_check
      _
    $region51: #{training_model_forward.1} parent=1 // pred_check_branch
      %648 = sbr.rel (0) target = $region53
    $region52: #{training_model_forward.1} parent=1 // pred_region
      %649 = dma.done [#allocation10], 256
    $region53: #{training_model_forward.1} parent=1 // pred_fallthru
      _
    %650 = vsyncpa [#allocation5], 1
    %651 = vsyncpa [#allocation7], 1
    %652 = vsyncpa [#allocation10], 1

</llo_original>
